<compile_context>
chip_gen: v7x
topology: tpu7x:2x2x1
jax: 0.10.0
libtpu: 0.0.40
codegen_flags: <defaults>
</compile_context>

<pallas_src>
import numpy as np

import jax
import jax.numpy as jnp
from jax.experimental import pallas as pl
from jax.experimental.pallas import tpu as pltpu


def _hardswish(x):
    # x * relu6(x + 3) / 6   (PyTorch nn.Hardswish)
    return x * jnp.clip(x + 3.0, 0.0, 6.0) * (1.0 / 6.0)


def _make_bottleneck_kernel(shortcut: bool, H: int):
    def kernel(x_ref, w1_ref, b1_ref, wb_ref, b2_ref, o_ref):
        # x_ref  : [M, W*Cin]   M = TB*H rows (TB images), lane-dense (=128)
        # w1_ref : [W*Cin, W*Chid]        bf16 block-diagonal 1x1 conv, BN1 scale folded
        # b1_ref : [1, W*Chid]            f32 BN1 bias, tiled over W
        # wb_ref : [3*W*Chid, W*Cout]     bf16 banded 3x3 conv, 3 ky taps stacked along K;
        #                                  BN2 scale and the stage-1 hardswish 1/6 folded in
        # b2_ref : [1, W*Cout]            f32 BN2 bias, tiled over W
        # o_ref  : [M, W*Cout]            lane-dense output (=128)
        x = x_ref[...]                                   # [M, W*Cin] f32
        xb = x.astype(jnp.bfloat16)

        # ---- stage 1: 1x1 conv (+BN1 scale) as one block-diagonal matmul ----
        y1 = jnp.dot(xb, w1_ref[...],
                     preferred_element_type=jnp.float32)           # [M, W*Chid]
        y1 = y1 + b1_ref[...]
        # Hardswish; its 1/6 factor is folded into wb (stage-2 weights).
        y1h = y1 * jnp.clip(y1 + 3.0, 0.0, 6.0)                    # [M, W*Chid] f32

        # ---- stage 2: 3x3 conv (pad=1) = sublane rolls + ONE banded matmul ----
        M = y1h.shape[0]
        row = jax.lax.broadcasted_iota(jnp.int32, y1h.shape, 0)
        rmod = row % H                                   # row index within its image
        up = pltpu.roll(y1h, shift=1, axis=0)            # up[m] = y1h[m-1]   (ky=0 tap)
        dn = pltpu.roll(y1h, shift=M - 1, axis=0)        # dn[m] = y1h[m+1]   (ky=2 tap)
        r0 = jnp.where(rmod != 0, up, 0.0)               # zero the top border of each image
        r2 = jnp.where(rmod != H - 1, dn, 0.0)           # zero the bottom border of each image
        rows = jnp.concatenate([r0, y1h, r2], axis=-1)   # [M, 3*W*Chid] (ky=0,1,2)
        rows = rows.astype(jnp.bfloat16)

        y2 = jnp.dot(rows, wb_ref[...],
                     preferred_element_type=jnp.float32)           # [M, W*Cout]
        y2 = y2 + b2_ref[...]
        y2 = y2 * jnp.clip(y2 + 3.0, 0.0, 6.0) * (1.0 / 6.0)       # Hardswish (f32)

        if shortcut:
            # Cin == Cout when shortcut -> identical [w, c] lane interleaving.
            y2 = y2 + x

        o_ref[...] = y2.astype(o_ref.dtype)

    return kernel


def bottleneck_pallas(x2d, w1bd, b1v, wb9, b2v, *, H, images_per_block, shortcut):
    # x2d: [B*H, W*Cin] f32, output: [B*H, W*Cout] f32
    BH, WCin = x2d.shape
    B = BH // H
    TB = images_per_block
    assert B % TB == 0, "batch must be divisible by images_per_block"
    M = TB * H
    assert M % 8 == 0, "rows per block must be a multiple of 8 (sublane tiling)"
    WCout = wb9.shape[-1]

    kernel = _make_bottleneck_kernel(shortcut, H)

    return pl.pallas_call(
        kernel,
        out_shape=jax.ShapeDtypeStruct((BH, WCout), jnp.float32),
        grid_spec=pltpu.PrefetchScalarGridSpec(
            num_scalar_prefetch=0,
            grid=(B // TB,),
            in_specs=[
                pl.BlockSpec((M, WCin), lambda b: (b, 0)),
                pl.BlockSpec(w1bd.shape, lambda b: (0, 0)),   # grid-invariant
                pl.BlockSpec(b1v.shape, lambda b: (0, 0)),
                pl.BlockSpec(wb9.shape, lambda b: (0, 0)),
                pl.BlockSpec(b2v.shape, lambda b: (0, 0)),
            ],
            out_specs=pl.BlockSpec((M, WCout), lambda b: (b, 0)),
        ),
        compiler_params=pltpu.CompilerParams(
            dimension_semantics=("parallel",)),
    )(x2d, w1bd, b1v, wb9, b2v)


def _fold_bn(gamma, beta, mean, var, eps=1e-5):
    scale = gamma / jnp.sqrt(var + eps)
    bias = beta - mean * scale
    return scale, bias


def build_kernel_operands(w1_io, w2_hwio, s1, b1, s2, b2, H, W):
    """Host-side constant folding into lane-dense matmul operands (bf16 weights)."""
    Cin, Chid = w1_io.shape
    KH, KW, _, Cout = w2_hwio.shape

    # Stage 1: block-diagonal [W*Cin, W*Chid]; BN1 scale folded into columns.
    w1s = np.asarray(w1_io) * np.asarray(s1)[None, :]
    w1bd = np.zeros((W * Cin, W * Chid), np.float32)
    for wcol in range(W):
        w1bd[wcol * Cin:(wcol + 1) * Cin,
             wcol * Chid:(wcol + 1) * Chid] = w1s
    b1v = np.tile(np.asarray(b1), W).reshape(1, W * Chid).astype(np.float32)

    # Stage 2: banded [W*Chid, W*Cout] per vertical tap ky, stacked along K into
    # a single [3*W*Chid, W*Cout] weight (order matches the kernel's lane concat
    # [ky=0, ky=1, ky=2]).  BN2 scale and the stage-1 hardswish 1/6 folded in.
    w2s = np.asarray(w2_hwio) * (np.asarray(s2)[None, None, None, :] / 6.0)
    wb = np.zeros((KH, W * Chid, W * Cout), np.float32)
    for ky in range(KH):
        for wo in range(W):
            for kx in range(KW):
                wi = wo + kx - 1
                if 0 <= wi < W:
                    wb[ky, wi * Chid:(wi + 1) * Chid,
                       wo * Cout:(wo + 1) * Cout] = w2s[ky, kx]
    wb9 = wb.reshape(KH * W * Chid, W * Cout)
    b2v = np.tile(np.asarray(b2), W).reshape(1, W * Cout).astype(np.float32)

    return (jnp.asarray(w1bd, jnp.bfloat16), jnp.asarray(b1v),
            jnp.asarray(wb9, jnp.bfloat16), jnp.asarray(b2v))


def reference(x_nhwc, w1_io, s1, b1, w2_hwio, s2, b2, shortcut):
    y = jax.lax.conv_general_dilated(
        x_nhwc, w1_io[None, None], (1, 1), "VALID",
        dimension_numbers=("NHWC", "HWIO", "NHWC"))
    y = _hardswish(y * s1 + b1)
    y = jax.lax.conv_general_dilated(
        y, w2_hwio, (1, 1), ((1, 1), (1, 1)),
        dimension_numbers=("NHWC", "HWIO", "NHWC"))
    y = _hardswish(y * s2 + b2)
    if shortcut:
        y = y + x_nhwc
    return y


if __name__ == "__main__":
    # Module config: Bottleneck(in_planes=8, out_planes=8, expansion=0.5)
    B, Cin, H, W = 2, 8, 16, 16
    Cout = 8
    Chid = int(Cout * 0.5)
    shortcut = (Cin == Cout)       # True, as in the PyTorch default path

    key = jax.random.PRNGKey(0)
    keys = jax.random.split(key, 12)

    # Input in PyTorch NCHW convention.
    x_nchw = jax.random.normal(keys[0], (B, Cin, H, W), jnp.float32)

    # Conv weights in PyTorch OIHW layout (bias=False).
    w1_oihw = 0.2 * jax.random.normal(keys[1], (Chid, Cin, 1, 1), jnp.float32)
    w2_oihw = 0.1 * jax.random.normal(keys[2], (Cout, Chid, 3, 3), jnp.float32)

    # Deterministic synthetic BatchNorm params (inference-mode BN).
    g1 = 1.0 + 0.1 * jax.random.normal(keys[3], (Chid,), jnp.float32)
    b1_ = 0.1 * jax.random.normal(keys[4], (Chid,), jnp.float32)
    m1 = 0.05 * jax.random.normal(keys[5], (Chid,), jnp.float32)
    v1 = jnp.abs(1.0 + 0.1 * jax.random.normal(keys[6], (Chid,), jnp.float32))
    g2 = 1.0 + 0.1 * jax.random.normal(keys[7], (Cout,), jnp.float32)
    b2_ = 0.1 * jax.random.normal(keys[8], (Cout,), jnp.float32)
    m2 = 0.05 * jax.random.normal(keys[9], (Cout,), jnp.float32)
    v2 = jnp.abs(1.0 + 0.1 * jax.random.normal(keys[10], (Cout,), jnp.float32))

    s1, bb1 = _fold_bn(g1, b1_, m1, v1)
    s2, bb2 = _fold_bn(g2, b2_, m2, v2)

    # --- convert to kernel layouts ---
    x_nhwc = jnp.transpose(x_nchw, (0, 2, 3, 1))                 # NCHW -> NHWC
    x2d = x_nhwc.reshape(B * H, W * Cin)                         # lane-dense

    w1_io = jnp.transpose(w1_oihw[:, :, 0, 0], (1, 0))           # [Cin, Chid]
    w2_hwio = jnp.transpose(w2_oihw, (2, 3, 1, 0))               # [3,3,Chid,Cout]

    w1bd, b1v, wb9, b2v = build_kernel_operands(
        w1_io, w2_hwio, s1, bb1, s2, bb2, H, W)

    # Images per grid block: whole batch if it fits in ~128 sublanes, else 128/H.
    TB = min(B, max(1, 128 // H))
    while B % TB != 0:
        TB -= 1

    out2d = bottleneck_pallas(x2d, w1bd, b1v, wb9, b2v,
                              H=H, images_per_block=TB, shortcut=shortcut)
    out2d = jax.block_until_ready(out2d)
    out_nhwc = out2d.reshape(B, H, W, Cout)

    # bf16 matmul operands -> compare against the f32 reference with a
    # bf16-appropriate tolerance.
    ref_nhwc = reference(x_nhwc, w1_io, s1, bb1, w2_hwio, s2, bb2, shortcut)
    assert jnp.allclose(out_nhwc, ref_nhwc, atol=2e-2, rtol=2e-2), (
        float(jnp.max(jnp.abs(out_nhwc - ref_nhwc))))

    # Back to PyTorch NCHW convention if a caller wants it.
    out_nchw = jnp.transpose(out_nhwc, (0, 3, 1, 2))
    jax.block_until_ready(out_nchw)
    print("KERNEL_OK")
</pallas_src>

<mosaic_0001>
module attributes {stable_mosaic.version = 11 : i64} {
  func.func @kernel(%arg0: i32, %arg1: memref<32x128xf32, #tpu.memory_space<vmem>>, %arg2: memref<128x64xbf16, #tpu.memory_space<vmem>>, %arg3: memref<1x64xf32, #tpu.memory_space<vmem>>, %arg4: memref<192x128xbf16, #tpu.memory_space<vmem>>, %arg5: memref<1x128xf32, #tpu.memory_space<vmem>>, %arg6: memref<32x128xf32, #tpu.memory_space<vmem>>) attributes {dimension_semantics = [#tpu.dimension_semantics<parallel>], iteration_bounds = array<i64: 1>, scalar_prefetch = 0 : i64, scratch_operands = 0 : i64, tpu.core_type = #tpu.core_type<tc>, window_params = [{transform_indices = @transform_0, window_bounds = array<i64: 32, 128>}, {pipeline_mode = #tpu.pipeline_mode<synchronous>, transform_indices = @transform_1, window_bounds = array<i64: 128, 64>}, {pipeline_mode = #tpu.pipeline_mode<synchronous>, transform_indices = @transform_2, window_bounds = array<i64: 1, 64>}, {pipeline_mode = #tpu.pipeline_mode<synchronous>, transform_indices = @transform_3, window_bounds = array<i64: 192, 128>}, {pipeline_mode = #tpu.pipeline_mode<synchronous>, transform_indices = @transform_4, window_bounds = array<i64: 1, 128>}, {transform_indices = @transform_5, window_bounds = array<i64: 32, 128>}]} {
    %c0 = arith.constant 0 : index
    %c0_0 = arith.constant 0 : index
    %0 = vector.load %arg1[%c0, %c0_0] : memref<32x128xf32, #tpu.memory_space<vmem>>, vector<32x128xf32>
    %1 = arith.truncf %0 : vector<32x128xf32> to vector<32x128xbf16>
    %c0_1 = arith.constant 0 : index
    %c0_2 = arith.constant 0 : index
    %2 = vector.load %arg2[%c0_1, %c0_2] : memref<128x64xbf16, #tpu.memory_space<vmem>>, vector<128x64xbf16>
    %cst = arith.constant dense<0.000000e+00> : vector<32x64xf32>
    %3 = tpu.matmul %1, %2, %cst {dimension_numbers = #tpu.dot_dimension_numbers<[1], [0], [0], [1], [0, 0, 1, 1], [], []>} : vector<32x128xbf16>, vector<128x64xbf16>, vector<32x64xf32> -> vector<32x64xf32>
    %c0_3 = arith.constant 0 : index
    %c0_4 = arith.constant 0 : index
    %4 = vector.load %arg3[%c0_3, %c0_4] : memref<1x64xf32, #tpu.memory_space<vmem>>, vector<1x64xf32>
    %5 = vector.broadcast %4 : vector<1x64xf32> to vector<32x64xf32>
    %6 = arith.addf %3, %5 : vector<32x64xf32>
    %cst_5 = arith.constant 3.000000e+00 : f32
    %7 = vector.broadcast %cst_5 : f32 to vector<32x64xf32>
    %8 = arith.addf %6, %7 : vector<32x64xf32>
    %cst_6 = arith.constant 0.000000e+00 : f32
    %cst_7 = arith.constant 6.000000e+00 : f32
    %9 = vector.broadcast %cst_6 : f32 to vector<32x64xf32>
    %10 = arith.maximumf %9, %8 : vector<32x64xf32>
    %11 = vector.broadcast %cst_7 : f32 to vector<32x64xf32>
    %12 = arith.minimumf %11, %10 : vector<32x64xf32>
    %13 = arith.mulf %6, %12 : vector<32x64xf32>
    %14 = tpu.iota {dimensions = array<i32: 0>} : vector<32x64xi32>
    %c16_i32 = arith.constant 16 : i32
    %c0_i32 = arith.constant 0 : i32
    %15 = arith.cmpi eq, %c16_i32, %c0_i32 : i32
    %c1_i32 = arith.constant 1 : i32
    %16 = arith.select %15, %c1_i32, %c16_i32 : i32
    %17 = vector.broadcast %16 : i32 to vector<32x64xi32>
    %18 = arith.remsi %14, %17 : vector<32x64xi32>
    %c0_i32_8 = arith.constant 0 : i32
    %19 = vector.broadcast %c0_i32_8 : i32 to vector<32x64xi32>
    %20 = arith.cmpi ne, %18, %19 : vector<32x64xi32>
    %c0_i32_9 = arith.constant 0 : i32
    %21 = vector.broadcast %c0_i32_9 : i32 to vector<32x64xi32>
    %22 = arith.cmpi slt, %18, %21 : vector<32x64xi32>
    %c0_i32_10 = arith.constant 0 : i32
    %23 = arith.cmpi slt, %16, %c0_i32_10 : i32
    %24 = vector.broadcast %23 : i1 to vector<32x64xi1>
    %25 = vector.broadcast %24 : vector<32x64xi1> to vector<32x64xi1>
    %26 = arith.xori %22, %25 : vector<32x64xi1>
    %27 = arith.andi %26, %20 : vector<32x64xi1>
    %28 = vector.broadcast %16 : i32 to vector<32x64xi32>
    %29 = arith.addi %18, %28 : vector<32x64xi32>
    %30 = arith.select %27, %29, %18 : vector<32x64xi1>, vector<32x64xi32>
    %c1_i32_11 = arith.constant 1 : i32
    %31 = tpu.dynamic_rotate %13 by %c1_i32_11 dim 0 : vector<32x64xf32>, i32 -> vector<32x64xf32>
    %c31_i32 = arith.constant 31 : i32
    %32 = tpu.dynamic_rotate %13 by %c31_i32 dim 0 : vector<32x64xf32>, i32 -> vector<32x64xf32>
    %c0_i32_12 = arith.constant 0 : i32
    %33 = vector.broadcast %c0_i32_12 : i32 to vector<32x64xi32>
    %34 = arith.cmpi ne, %30, %33 : vector<32x64xi32>
    %cst_13 = arith.constant 0.000000e+00 : f32
    %35 = vector.broadcast %cst_13 : f32 to vector<32x64xf32>
    %36 = arith.select %34, %31, %35 : vector<32x64xi1>, vector<32x64xf32>
    %c15_i32 = arith.constant 15 : i32
    %37 = vector.broadcast %c15_i32 : i32 to vector<32x64xi32>
    %38 = arith.cmpi ne, %30, %37 : vector<32x64xi32>
    %cst_14 = arith.constant 0.000000e+00 : f32
    %39 = vector.broadcast %cst_14 : f32 to vector<32x64xf32>
    %40 = arith.select %38, %32, %39 : vector<32x64xi1>, vector<32x64xf32>
    %41 = tpu.concatenate %36, %13, %40 in 1 : vector<32x64xf32>, vector<32x64xf32>, vector<32x64xf32> -> vector<32x192xf32>
    %42 = arith.truncf %41 : vector<32x192xf32> to vector<32x192xbf16>
    %c0_15 = arith.constant 0 : index
    %c0_16 = arith.constant 0 : index
    %43 = vector.load %arg4[%c0_15, %c0_16] : memref<192x128xbf16, #tpu.memory_space<vmem>>, vector<192x128xbf16>
    %cst_17 = arith.constant dense<0.000000e+00> : vector<32x128xf32>
    %44 = tpu.matmul %42, %43, %cst_17 {dimension_numbers = #tpu.dot_dimension_numbers<[1], [0], [0], [1], [0, 0, 1, 1], [], []>} : vector<32x192xbf16>, vector<192x128xbf16>, vector<32x128xf32> -> vector<32x128xf32>
    %c0_18 = arith.constant 0 : index
    %c0_19 = arith.constant 0 : index
    %45 = vector.load %arg5[%c0_18, %c0_19] : memref<1x128xf32, #tpu.memory_space<vmem>>, vector<1x128xf32>
    %46 = vector.broadcast %45 : vector<1x128xf32> to vector<32x128xf32>
    %47 = arith.addf %44, %46 : vector<32x128xf32>
    %cst_20 = arith.constant 3.000000e+00 : f32
    %48 = vector.broadcast %cst_20 : f32 to vector<32x128xf32>
    %49 = arith.addf %47, %48 : vector<32x128xf32>
    %cst_21 = arith.constant 0.000000e+00 : f32
    %cst_22 = arith.constant 6.000000e+00 : f32
    %50 = vector.broadcast %cst_21 : f32 to vector<32x128xf32>
    %51 = arith.maximumf %50, %49 : vector<32x128xf32>
    %52 = vector.broadcast %cst_22 : f32 to vector<32x128xf32>
    %53 = arith.minimumf %52, %51 : vector<32x128xf32>
    %54 = arith.mulf %47, %53 : vector<32x128xf32>
    %cst_23 = arith.constant 0.166666672 : f32
    %55 = vector.broadcast %cst_23 : f32 to vector<32x128xf32>
    %56 = arith.mulf %54, %55 : vector<32x128xf32>
    %57 = arith.addf %56, %0 : vector<32x128xf32>
    %c0_24 = arith.constant 0 : index
    %c0_25 = arith.constant 0 : index
    %58 = vector.load %arg6[%c0_24, %c0_25] : memref<32x128xf32, #tpu.memory_space<vmem>>, vector<32x128xf32>
    tpu.vector_store %arg6[%c0_24, %c0_25], %57 {strides = array<i32>} : memref<32x128xf32, #tpu.memory_space<vmem>>, vector<32x128xf32>,
    return
  }
  func.func @transform_0(%arg0: i32) -> (i32, i32) {
    %c0_i32 = arith.constant 0 : i32
    %c0_i32_0 = arith.constant 0 : i32
    return %arg0, %c0_i32 : i32, i32
  }
  func.func @transform_1(%arg0: i32) -> (i32, i32) {
    %c0_i32 = arith.constant 0 : i32
    %c0_i32_0 = arith.constant 0 : i32
    %c0_i32_1 = arith.constant 0 : i32
    return %c0_i32, %c0_i32_0 : i32, i32
  }
  func.func @transform_2(%arg0: i32) -> (i32, i32) {
    %c0_i32 = arith.constant 0 : i32
    %c0_i32_0 = arith.constant 0 : i32
    %c0_i32_1 = arith.constant 0 : i32
    return %c0_i32, %c0_i32_0 : i32, i32
  }
  func.func @transform_3(%arg0: i32) -> (i32, i32) {
    %c0_i32 = arith.constant 0 : i32
    %c0_i32_0 = arith.constant 0 : i32
    %c0_i32_1 = arith.constant 0 : i32
    return %c0_i32, %c0_i32_0 : i32, i32
  }
  func.func @transform_4(%arg0: i32) -> (i32, i32) {
    %c0_i32 = arith.constant 0 : i32
    %c0_i32_0 = arith.constant 0 : i32
    %c0_i32_1 = arith.constant 0 : i32
    return %c0_i32, %c0_i32_0 : i32, i32
  }
  func.func @transform_5(%arg0: i32) -> (i32, i32) {
    %c0_i32 = arith.constant 0 : i32
    %c0_i32_0 = arith.constant 0 : i32
    return %arg0, %c0_i32 : i32, i32
  }
}

</mosaic_0001>

<llo_original>
// kernel: tpu_custom_call.1
$region0: #{tpu_custom_call.1}
  #allocation0 [shape = 'u32[]', space=smem, size = 0x4, offset = 0x4, fixed_abs, tag = 'smem constant byte address 0x4 - core index']
  #allocation1 [shape = 'u32[144,128]{1,0:T(1,128)}', space=vmem, size = 0x12000, scoped, tag = 'internal scratch']
  %s0 = inlined_call_operand.hbm [shape: f32[32,128], index: 0, kind: input, shape index: {}]
  %s1 = inlined_call_operand.vmem [shape: bf16[128,64], index: 1, kind: input, shape index: {}]
  %s2 = inlined_call_operand.vmem [shape: f32[1,64], index: 2, kind: input, shape index: {}]
  %s3 = inlined_call_operand.vmem [shape: bf16[192,128], index: 3, kind: input, shape index: {}]
  %s4 = inlined_call_operand.vmem [shape: f32[1,128], index: 4, kind: input, shape index: {}]
  %s5 = inlined_call_operand.hbm [shape: f32[32,128], index: 5, kind: output, shape index: {}]
  %s6 = sld [smem:[#allocation0]]
  $region34: #{tpu_custom_call.1} parent=0
    _
  %s8 = ssub.s32 1, %s6
  %s9 = scalar_select 0, %s8, %s6
  $region1: #{tpu_custom_call.1} parent=0
    #allocation2 [shape = 'u8[16384]{0}', space=vmem, size = 0x4000, scoped, tag = 'input window, operand 0, single buffered']
    #allocation3 [shape = 's32[1]{0}', space=sflag, size = 0x4, scoped, tag = 'scoped memory for tpu_custom_call.1']
    #allocation4 [shape = 's32[1]{0}', space=sflag, size = 0x4, scoped, tag = 'scoped memory for tpu_custom_call.1']
    #allocation5 [shape = 'u8[16384]{0}', space=vmem, size = 0x4000, scoped, tag = 'output window, operand 0, single buffered']
    %10 = vsyncpa [#allocation3], 0
    %11 = vsyncpa [#allocation4], 0
    // Predicated region
    $region2: #{tpu_custom_call.1} parent=1 // pred_check
      _
    $region3: #{tpu_custom_call.1} parent=1 // pred_check_branch
      %13 = sbr.rel (0) target = $region5
    $region4: #{tpu_custom_call.1} parent=1 // pred_region
      %s15 = ssub.s32 512, 512
      %16 = vsyncadd [#allocation3], %s15
      %s17 = sshll.u32 [#allocation2], 4
      %s18 = int_to_ptr.vmem [resolvable:$true] %s17
      %23 = dma.hbm_to_vmem [thread:$0]  %s0, 512, %s18, [#allocation3], 128, 128, 8
    $region5: #{tpu_custom_call.1} parent=1 // pred_fallthru
      _
    // Predicated region
    $region6: #{tpu_custom_call.1} parent=1 // pred_check
      _
    $region7: #{tpu_custom_call.1} parent=1 // pred_check_branch
      %25 = sbr.rel (0) target = $region9
    $region8: #{tpu_custom_call.1} parent=1 // pred_region
      _
    $region9: #{tpu_custom_call.1} parent=1 // pred_fallthru
      _
    // Predicated region
    $region10: #{tpu_custom_call.1} parent=1 // pred_check
      _
    $region11: #{tpu_custom_call.1} parent=1 // pred_check_branch
      %27 = sbr.rel (0) target = $region13
    $region12: #{tpu_custom_call.1} parent=1 // pred_region
      _
    $region13: #{tpu_custom_call.1} parent=1 // pred_fallthru
      _
    // Predicated region
    $region14: #{tpu_custom_call.1} parent=1 // pred_check
      _
    $region15: #{tpu_custom_call.1} parent=1 // pred_check_branch
      %29 = sbr.rel (0) target = $region17
    $region16: #{tpu_custom_call.1} parent=1 // pred_region
      _
    $region17: #{tpu_custom_call.1} parent=1 // pred_fallthru
      _
    // Predicated region
    $region18: #{tpu_custom_call.1} parent=1 // pred_check
      _
    $region19: #{tpu_custom_call.1} parent=1 // pred_check_branch
      %31 = sbr.rel (0) target = $region21
    $region20: #{tpu_custom_call.1} parent=1 // pred_region
      _
    $region21: #{tpu_custom_call.1} parent=1 // pred_fallthru
      _
    // Predicated region
    $region22: #{tpu_custom_call.1} parent=1 // pred_check
      _
    $region23: #{tpu_custom_call.1} parent=1 // pred_check_branch
      %33 = sbr.rel (0) target = $region25
    $region24: #{tpu_custom_call.1} parent=1 // pred_region
      %34 = dma.done [#allocation3], 512
    $region25: #{tpu_custom_call.1} parent=1 // pred_fallthru
      _
    %v36 = vld [vmem:[#allocation2] sm:$0xff]
    %v37 = vld [vmem:[#allocation2 + $0x8] sm:$0xff]
    %v38 = vld [vmem:[#allocation2 + $0x10] sm:$0xff]
    %v39 = vld [vmem:[#allocation2 + $0x18] sm:$0xff]
    %v40 = vpack.c.bf16 %v37, %v36
    %v41 = vpack.c.bf16 %v39, %v38
    %v42 = vld [vmem:[%s1] sm:$0xf]
    %v43 = vld [vmem:[%s1 + $0x4] sm:$0xf]
    %v44 = vld [vmem:[%s1 + $0x8] sm:$0xf]
    %v45 = vld [vmem:[%s1 + $0xc] sm:$0xf]
    %v46 = vld [vmem:[%s1 + $0x10] sm:$0xf]
    %v47 = vld [vmem:[%s1 + $0x14] sm:$0xf]
    %v48 = vld [vmem:[%s1 + $0x18] sm:$0xf]
    %v49 = vld [vmem:[%s1 + $0x1c] sm:$0xf]
    %v50 = vld [vmem:[%s1 + $0x20] sm:$0xf]
    %v51 = vld [vmem:[%s1 + $0x24] sm:$0xf]
    %v52 = vld [vmem:[%s1 + $0x28] sm:$0xf]
    %v53 = vld [vmem:[%s1 + $0x2c] sm:$0xf]
    %v54 = vld [vmem:[%s1 + $0x30] sm:$0xf]
    %v55 = vld [vmem:[%s1 + $0x34] sm:$0xf]
    %v56 = vld [vmem:[%s1 + $0x38] sm:$0xf]
    %v57 = vld [vmem:[%s1 + $0x3c] sm:$0xf]
    %v58 = vld [vmem:[%s2] sm:$0x1]
    %v60 = vlaneseq
    %v61 = vshrl.u32 %v60, 7
    %v62 = vsub.s32 0, %v61
    %v63 = vrot.slane %v58, %v62
    %v81 = vunpack.c.l.b16 %v42
    %v82 = vunpack.c.l.b16 %v43
    %v83 = vunpack.c.l.b16 %v44
    %v84 = vunpack.c.l.b16 %v45
    %v85 = vunpack.c.l.b16 %v46
    %v86 = vunpack.c.l.b16 %v47
    %v87 = vunpack.c.l.b16 %v48
    %v88 = vunpack.c.l.b16 %v49
    %v89 = vunpack.c.l.b16 %v50
    %v90 = vunpack.c.l.b16 %v51
    %v91 = vunpack.c.l.b16 %v52
    %v92 = vunpack.c.l.b16 %v53
    %v93 = vunpack.c.l.b16 %v54
    %v94 = vunpack.c.l.b16 %v55
    %v95 = vunpack.c.l.b16 %v56
    %v96 = vunpack.c.l.b16 %v57
    %v97 = vpack.c.b16 %v82, %v81
    %v98 = vpack.c.b16 %v84, %v83
    %v99 = vpack.c.b16 %v86, %v85
    %v100 = vpack.c.b16 %v88, %v87
    %v101 = vpack.c.b16 %v90, %v89
    %v102 = vpack.c.b16 %v92, %v91
    %v103 = vpack.c.b16 %v94, %v93
    %v104 = vpack.c.b16 %v96, %v95
    %113 = vmatprep.subr.bf16.mxu0 0
    %114 = vmatpush1.bf16.msra.mxu0 %v97
    %115 = vmatprep.subr.bf16.mxu0 0
    %116 = vmatpush1.bf16.msra.mxu0 %v98
    %117 = vmatprep.subr.bf16.mxu0 0
    %118 = vmatpush1.bf16.msra.mxu0 %v99
    %119 = vmatprep.subr.bf16.mxu0 0
    %120 = vmatpush1.bf16.msra.mxu0 %v100
    %121 = vmatprep.subr.bf16.mxu0 0
    %122 = vmatpush1.bf16.msra.mxu0 %v101
    %123 = vmatprep.subr.bf16.mxu0 0
    %124 = vmatpush1.bf16.msra.mxu0 %v102
    %125 = vmatprep.subr.bf16.mxu0 0
    %126 = vmatpush1.bf16.msra.mxu0 %v103
    %127 = vmatprep.subr.bf16.mxu0 0
    %128 = vmatpush1.bf16.msra.mxu0 %v104
    %129 = vmatprep.subr.bf16.mxu0 0
    %130 = vmatpush1.bf16.msra.mxu0 0
    %131 = vmatprep.subr.bf16.mxu0 0
    %132 = vmatpush1.bf16.msra.mxu0 0
    %133 = vmatprep.subr.bf16.mxu0 0
    %134 = vmatpush1.bf16.msra.mxu0 0
    %135 = vmatprep.subr.bf16.mxu0 0
    %136 = vmatpush1.bf16.msra.mxu0 0
    %137 = vmatprep.subr.bf16.mxu0 0
    %138 = vmatpush1.bf16.msra.mxu0 0
    %139 = vmatprep.subr.bf16.mxu0 0
    %140 = vmatpush1.bf16.msra.mxu0 0
    %141 = vmatprep.subr.bf16.mxu0 0
    %142 = vmatpush1.bf16.msra.mxu0 0
    %143 = vmatprep.subr.bf16.mxu0 0
    %144 = vmatpush1.bf16.msra.mxu0 0
    %145 = vmatprep.mubr.bf16.mxu0 0
    %146 = vmatmul.mubr.bf16.gmra.mrb[0].mxu0 %v40
    %v147 = vpop.f32.mrb[0].mxu0
    %v148 = vadd.f32 %v63, %v147
    %v149 = vpop.f32.mrb[0].mxu0
    %v150 = vpop.f32.mrb[0].mxu0
    %v151 = vadd.f32 %v63, %v150
    %v152 = vpop.f32.mrb[0].mxu0
    %153 = vmatprep.mubr.bf16.mxu0 0
    %154 = vmatmul.mubr.bf16.gmra.mrb[0].mxu0 %v41
    %v155 = vpop.f32.mrb[0].mxu0
    %v156 = vadd.f32 %v63, %v155
    %v157 = vpop.f32.mrb[0].mxu0
    %v158 = vpop.f32.mrb[0].mxu0
    %v159 = vadd.f32 %v63, %v158
    %v160 = vpop.f32.mrb[0].mxu0
    %161 = vdwg.mxu0
    %v162 = vadd.f32 %v148, 3.0
    %v163 = vadd.f32 %v151, 3.0
    %v164 = vadd.f32 %v156, 3.0
    %v165 = vadd.f32 %v159, 3.0
    %v166 = vmax.f32 %v162, 0.0
    %v167 = vmax.f32 %v163, 0.0
    %v168 = vmax.f32 %v164, 0.0
    %v169 = vmax.f32 %v165, 0.0
    %v170 = vmin.f32 %v166, 6.0
    %v171 = vmin.f32 %v167, 6.0
    %v172 = vmin.f32 %v168, 6.0
    %v173 = vmin.f32 %v169, 6.0
    %v174 = vmul.f32 %v148, %v170
    %v175 = vmul.f32 %v151, %v171
    %v176 = vmul.f32 %v156, %v172
    %v177 = vmul.f32 %v159, %v173
    %v178 = vlaneseq
    %v179 = vshrl.u32 %v178, 7
    %v180 = vadd.s32 %v179, 8
    %v181 = vadd.s32 %v179, 16
    %v182 = vadd.s32 %v179, 24
    %vm183 = vcmp.lt.s32.totalorder %v179, 0
    %v184 = vsub.s32 0, %v179
    %v185 = vsel %vm183, %v184, %v179
    %v186 = vshrl.u32 %v185, 4
    %v187 = vand.u32 %v185, 15
    %v188 = vsub.s32 0, %v187
    %v189 = vsel %vm183, %v188, %v187
    %vm190 = vcmp.lt.s32.totalorder %v180, 0
    %v191 = vsub.s32 0, %v180
    %v192 = vsel %vm190, %v191, %v180
    %v193 = vshrl.u32 %v192, 4
    %v194 = vand.u32 %v192, 15
    %v195 = vsub.s32 0, %v194
    %v196 = vsel %vm190, %v195, %v194
    %vm197 = vcmp.lt.s32.totalorder %v181, 0
    %v198 = vsub.s32 0, %v181
    %v199 = vsel %vm197, %v198, %v181
    %v200 = vshrl.u32 %v199, 4
    %v201 = vand.u32 %v199, 15
    %v202 = vsub.s32 0, %v201
    %v203 = vsel %vm197, %v202, %v201
    %vm204 = vcmp.lt.s32.totalorder %v182, 0
    %v205 = vsub.s32 0, %v182
    %v206 = vsel %vm204, %v205, %v182
    %v207 = vshrl.u32 %v206, 4
    %v208 = vand.u32 %v206, 15
    %v209 = vsub.s32 0, %v208
    %v210 = vsel %vm204, %v209, %v208
    %vm211 = vcmp.ne.s32.totalorder %v189, 0
    %vm212 = vcmp.ne.s32.totalorder %v196, 0
    %vm213 = vcmp.ne.s32.totalorder %v203, 0
    %vm214 = vcmp.ne.s32.totalorder %v210, 0
    %vm215 = vcmp.lt.s32.totalorder %v189, 0
    %vm216 = vcmp.lt.s32.totalorder %v196, 0
    %vm217 = vcmp.lt.s32.totalorder %v203, 0
    %vm218 = vcmp.lt.s32.totalorder %v210, 0
    %vm219 = vmand %vm215, %vm211
    %vm220 = vmand %vm216, %vm212
    %vm221 = vmand %vm217, %vm213
    %vm222 = vmand %vm218, %vm214
    %v223 = vadd.s32 %v189, 16
    %v224 = vadd.s32 %v196, 16
    %v225 = vadd.s32 %v203, 16
    %v226 = vadd.s32 %v210, 16
    %v227 = vsel %vm219, %v223, %v189
    %v228 = vsel %vm220, %v224, %v196
    %v229 = vsel %vm221, %v225, %v203
    %v230 = vsel %vm222, %v226, %v210
    %v231 = vrot.slane %v174, 7
    %v232 = vrot.slane %v175, 7
    %v233 = vrot.slane %v176, 7
    %v234 = vrot.slane %v177, 7
    %vm235 = vcmp.lt.s32.totalorder %v179, 1
    %v236 = vsel %vm235, %v233, %v234
    %v237 = vsel %vm235, %v232, %v233
    %v238 = vsel %vm235, %v231, %v232
    %v239 = vsel %vm235, %v234, %v231
    %v240 = vrot.slane %v174, 1
    %v241 = vrot.slane %v175, 1
    %v242 = vrot.slane %v176, 1
    %v243 = vrot.slane %v177, 1
    %vm244 = vcmp.lt.s32.totalorder %v179, 7
    %v245 = vsel %vm244, %v242, %v243
    %v246 = vsel %vm244, %v241, %v242
    %v247 = vsel %vm244, %v240, %v241
    %v248 = vsel %vm244, %v243, %v240
    %vm249 = vcmp.ne.s32.totalorder %v227, 0
    %vm250 = vcmp.ne.s32.totalorder %v228, 0
    %vm251 = vcmp.ne.s32.totalorder %v229, 0
    %vm252 = vcmp.ne.s32.totalorder %v230, 0
    %v253 = vsel %vm249, %v239, 0.0
    %v254 = vsel %vm250, %v238, 0.0
    %v255 = vsel %vm251, %v237, 0.0
    %v256 = vsel %vm252, %v236, 0.0
    %vm257 = vcmp.ne.s32.totalorder %v227, 15
    %vm258 = vcmp.ne.s32.totalorder %v228, 15
    %vm259 = vcmp.ne.s32.totalorder %v229, 15
    %vm260 = vcmp.ne.s32.totalorder %v230, 15
    %v261 = vsel %vm257, %v247, 0.0
    %v262 = vsel %vm258, %v246, 0.0
    %v263 = vsel %vm259, %v245, 0.0
    %v264 = vsel %vm260, %v248, 0.0
    %269 = vrot.lane.b32.xlu0 %v174, 64
    %v270 = vpop.permute.xlu0 %269
    %271 = vrot.lane.b32.xlu0 %v175, 64
    %v272 = vpop.permute.xlu0 %271
    %273 = vrot.lane.b32.xlu0 %v176, 64
    %v274 = vpop.permute.xlu0 %273
    %275 = vrot.lane.b32.xlu0 %v177, 64
    %v276 = vpop.permute.xlu0 %275
    %vm281 = vcmask 523264
    %v282 = vsel %vm281, %v253, %v270
    %v283 = vsel %vm281, %v254, %v272
    %v284 = vsel %vm281, %v255, %v274
    %v285 = vsel %vm281, %v256, %v276
    %v286 = vpack.c.bf16 %v283, %v282
    %v287 = vpack.c.bf16 %v262, %v261
    %v288 = vpack.c.bf16 %v285, %v284
    %v289 = vpack.c.bf16 %v264, %v263
    %v290 = vld [vmem:[%s3] sm:$0xf]
    %v291 = vld [vmem:[%s3 + $0x4] sm:$0xf]
    %v292 = vld [vmem:[%s3 + $0x8] sm:$0xf]
    %v293 = vld [vmem:[%s3 + $0xc] sm:$0xf]
    %v294 = vld [vmem:[%s3 + $0x10] sm:$0xf]
    %v295 = vld [vmem:[%s3 + $0x14] sm:$0xf]
    %v296 = vld [vmem:[%s3 + $0x18] sm:$0xf]
    %v297 = vld [vmem:[%s3 + $0x1c] sm:$0xf]
    %v298 = vld [vmem:[%s3 + $0x20] sm:$0xf]
    %v299 = vld [vmem:[%s3 + $0x24] sm:$0xf]
    %v300 = vld [vmem:[%s3 + $0x28] sm:$0xf]
    %v301 = vld [vmem:[%s3 + $0x2c] sm:$0xf]
    %v302 = vld [vmem:[%s3 + $0x30] sm:$0xf]
    %v303 = vld [vmem:[%s3 + $0x34] sm:$0xf]
    %v304 = vld [vmem:[%s3 + $0x38] sm:$0xf]
    %v305 = vld [vmem:[%s3 + $0x3c] sm:$0xf]
    %v306 = vld [vmem:[%s3 + $0x40] sm:$0xf]
    %v307 = vld [vmem:[%s3 + $0x44] sm:$0xf]
    %v308 = vld [vmem:[%s3 + $0x48] sm:$0xf]
    %v309 = vld [vmem:[%s3 + $0x4c] sm:$0xf]
    %v310 = vld [vmem:[%s3 + $0x50] sm:$0xf]
    %v311 = vld [vmem:[%s3 + $0x54] sm:$0xf]
    %v312 = vld [vmem:[%s3 + $0x58] sm:$0xf]
    %v313 = vld [vmem:[%s3 + $0x5c] sm:$0xf]
    %v314 = vld [vmem:[%s4] sm:$0x1]
    %v316 = vlaneseq
    %v317 = vshrl.u32 %v316, 7
    %v318 = vsub.s32 0, %v317
    %v319 = vrot.slane %v314, %v318
    %v345 = vunpack.c.l.b16 %v290
    %v346 = vunpack.c.l.b16 %v291
    %v347 = vunpack.c.l.b16 %v292
    %v348 = vunpack.c.l.b16 %v293
    %v349 = vunpack.c.l.b16 %v294
    %v350 = vunpack.c.l.b16 %v295
    %v351 = vunpack.c.l.b16 %v296
    %v352 = vunpack.c.l.b16 %v297
    %v353 = vunpack.c.l.b16 %v298
    %v354 = vunpack.c.l.b16 %v299
    %v355 = vunpack.c.l.b16 %v300
    %v356 = vunpack.c.l.b16 %v301
    %v357 = vunpack.c.l.b16 %v302
    %v358 = vunpack.c.l.b16 %v303
    %v359 = vunpack.c.l.b16 %v304
    %v360 = vunpack.c.l.b16 %v305
    %v361 = vunpack.c.l.b16 %v306
    %v362 = vunpack.c.l.b16 %v307
    %v363 = vunpack.c.l.b16 %v308
    %v364 = vunpack.c.l.b16 %v309
    %v365 = vunpack.c.l.b16 %v310
    %v366 = vunpack.c.l.b16 %v311
    %v367 = vunpack.c.l.b16 %v312
    %v368 = vunpack.c.l.b16 %v313
    %v369 = vpack.c.b16 %v346, %v345
    %v370 = vpack.c.b16 %v348, %v347
    %v371 = vpack.c.b16 %v350, %v349
    %v372 = vpack.c.b16 %v352, %v351
    %v373 = vpack.c.b16 %v354, %v353
    %v374 = vpack.c.b16 %v356, %v355
    %v375 = vpack.c.b16 %v358, %v357
    %v376 = vpack.c.b16 %v360, %v359
    %v377 = vpack.c.b16 %v362, %v361
    %v378 = vpack.c.b16 %v364, %v363
    %v379 = vpack.c.b16 %v366, %v365
    %v380 = vpack.c.b16 %v368, %v367
    %v394 = vsel %vm281, %v287, 0
    %v397 = vsel %vm281, %v289, 0
    %399 = vmatprep.subr.bf16.mxu0 0
    %400 = vmatpush1.bf16.msra.mxu0 %v369
    %401 = vmatprep.subr.bf16.mxu0 0
    %402 = vmatpush1.bf16.msra.mxu0 %v370
    %403 = vmatprep.subr.bf16.mxu0 0
    %404 = vmatpush1.bf16.msra.mxu0 %v371
    %405 = vmatprep.subr.bf16.mxu0 0
    %406 = vmatpush1.bf16.msra.mxu0 %v372
    %407 = vmatprep.subr.bf16.mxu0 0
    %408 = vmatpush1.bf16.msra.mxu0 %v373
    %409 = vmatprep.subr.bf16.mxu0 0
    %410 = vmatpush1.bf16.msra.mxu0 %v374
    %411 = vmatprep.subr.bf16.mxu0 0
    %412 = vmatpush1.bf16.msra.mxu0 %v375
    %413 = vmatprep.subr.bf16.mxu0 0
    %414 = vmatpush1.bf16.msra.mxu0 %v376
    %415 = vmatprep.subr.bf16.mxu0 0
    %416 = vmatpush1.bf16.msra.mxu0 %v377
    %417 = vmatprep.subr.bf16.mxu0 0
    %418 = vmatpush1.bf16.msra.mxu0 %v378
    %419 = vmatprep.subr.bf16.mxu0 0
    %420 = vmatpush1.bf16.msra.mxu0 %v379
    %421 = vmatprep.subr.bf16.mxu0 0
    %422 = vmatpush1.bf16.msra.mxu0 %v380
    %423 = vmatprep.subr.bf16.mxu0 0
    %424 = vmatpush1.bf16.msra.mxu0 0
    %425 = vmatprep.subr.bf16.mxu0 0
    %426 = vmatpush1.bf16.msra.mxu0 0
    %427 = vmatprep.subr.bf16.mxu0 0
    %428 = vmatpush1.bf16.msra.mxu0 0
    %429 = vmatprep.subr.bf16.mxu0 0
    %430 = vmatpush1.bf16.msra.mxu0 0
    %431 = vmatprep.mubr.bf16.mxu0 %v394
    %432 = vmatmul.mubr.bf16.gmra.mrb[0].mxu0 %v286
    %v433 = vpop.f32.mrb[0].mxu0
    %v434 = vadd.f32 %v319, %v433
    %v435 = vpop.f32.mrb[0].mxu0
    %v436 = vpop.f32.mrb[0].mxu0
    %v437 = vadd.f32 %v319, %v436
    %v438 = vpop.f32.mrb[0].mxu0
    %439 = vmatprep.mubr.bf16.mxu0 %v397
    %440 = vmatmul.mubr.bf16.gmra.mrb[0].mxu0 %v288
    %v441 = vpop.f32.mrb[0].mxu0
    %v442 = vadd.f32 %v319, %v441
    %v443 = vpop.f32.mrb[0].mxu0
    %v444 = vpop.f32.mrb[0].mxu0
    %v445 = vadd.f32 %v319, %v444
    %v446 = vpop.f32.mrb[0].mxu0
    %447 = vdwg.mxu0
    %v448 = vadd.f32 %v434, 3.0
    %v449 = vadd.f32 %v437, 3.0
    %v450 = vadd.f32 %v442, 3.0
    %v451 = vadd.f32 %v445, 3.0
    %v452 = vmax.f32 %v448, 0.0
    %v453 = vmax.f32 %v449, 0.0
    %v454 = vmax.f32 %v450, 0.0
    %v455 = vmax.f32 %v451, 0.0
    %v456 = vmin.f32 %v452, 6.0
    %v457 = vmin.f32 %v453, 6.0
    %v458 = vmin.f32 %v454, 6.0
    %v459 = vmin.f32 %v455, 6.0
    %v460 = vmul.f32 %v434, %v456
    %v461 = vmul.f32 %v437, %v457
    %v462 = vmul.f32 %v442, %v458
    %v463 = vmul.f32 %v445, %v459
    %v464 = vmul.f32 %v460, 0.16666667
    %v465 = vmul.f32 %v461, 0.16666667
    %v466 = vmul.f32 %v462, 0.16666667
    %v467 = vmul.f32 %v463, 0.16666667
    %v468 = vadd.f32 %v464, %v36
    %v469 = vadd.f32 %v465, %v37
    %v470 = vadd.f32 %v466, %v38
    %v471 = vadd.f32 %v467, %v39
    %472 = vst [vmem:[#allocation5] sm:$0xff] %v468
    %473 = vst [vmem:[#allocation5 + $0x8] sm:$0xff] %v469
    %474 = vst [vmem:[#allocation5 + $0x10] sm:$0xff] %v470
    %475 = vst [vmem:[#allocation5 + $0x18] sm:$0xff] %v471
    // Predicated region
    $region26: #{tpu_custom_call.1} parent=1 // pred_check
      _
    $region27: #{tpu_custom_call.1} parent=1 // pred_check_branch
      %477 = sbr.rel (0) target = $region29
    $region28: #{tpu_custom_call.1} parent=1 // pred_region
      %s479 = ssub.s32 512, 512
      %480 = vsyncadd [#allocation4], %s479
      %s481 = sshll.u32 [#allocation5], 4
      %s482 = int_to_ptr.vmem [resolvable:$true] %s481
      %487 = dma.vmem_to_hbm [thread:$0]  %s482, 512, %s5, [#allocation4], 128, 128, 8
    $region29: #{tpu_custom_call.1} parent=1 // pred_fallthru
      _
    // Predicated region
    $region30: #{tpu_custom_call.1} parent=1 // pred_check
      _
    $region31: #{tpu_custom_call.1} parent=1 // pred_check_branch
      %489 = sbr.rel (0) target = $region33
    $region32: #{tpu_custom_call.1} parent=1 // pred_region
      %490 = dma.done [#allocation4], 512
    $region33: #{tpu_custom_call.1} parent=1 // pred_fallthru
      _
    %491 = vsyncpa [#allocation3], 1
    %492 = vsyncpa [#allocation4], 1

</llo_original>
